<compile_context>
chip_gen: v6e
topology: v6e:2x2x1
jax: 0.10.0
libtpu: 0.0.40
codegen_flags: <defaults>
</compile_context>

<pallas_src>
import functools

import jax
import jax.numpy as jnp
from jax.experimental import pallas as pl
from jax.experimental.pallas import tpu as pltpu


def _rnn_fc_kernel(x_ref, wih_ref, whh_ref, bias_ref, wfc_ref, bfc_ref, out_ref, *, B, T):
    """Single invocation: full recurrence + folded FC head.

    x_ref   : (T*B, D)  time-major flattened input
    wih_ref : (D, H)    input->hidden weight, pre-transposed to (in, out)
    whh_ref : (H, H)    hidden->hidden weight, pre-transposed to (in, out)
    bias_ref: (1, H)    fused b_ih + b_hh
    wfc_ref : (H, O)    folded fc1@fc2@fc3@fc4 weight
    bfc_ref : (1, O)    folded FC bias
    out_ref : (B, O)
    """
    w_hh = whh_ref[...]

    # Hoisted input projection for ALL timesteps in one MXU matmul; fused bias added once.
    xw = (jnp.dot(x_ref[...], wih_ref[...], preferred_element_type=jnp.float32)
          + bias_ref[...])                                   # (T*B, H)

    # Serial recurrence: only h @ W_hh + tanh is on the critical path.
    # T is small and static -> plain Python loop fully unrolls at trace time
    # (static row-slices, full LLO scheduling visibility).
    h = jnp.tanh(xw[0:B, :])                                 # h_0 == 0 -> step 0 is tanh(x0 W + b)
    for t in range(1, T):
        h = jnp.tanh(xw[t * B:(t + 1) * B, :]
                     + jnp.dot(h, w_hh, preferred_element_type=jnp.float32))

    # fc1..fc4 folded into a single affine map (done in the wrapper).
    out_ref[...] = (jnp.dot(h, wfc_ref[...], preferred_element_type=jnp.float32)
                    + bfc_ref[...]).astype(out_ref.dtype)


@jax.jit
def simple_rnn_forward(x, params):
    """x: (B, T, D) float32, batch_first like PyTorch nn.RNN."""
    B, T, D = x.shape

    # Layout only: time-major flatten so the kernel sees a 2-D slab and each timestep is
    # a contiguous static row-slice.  ~1 KB at these sizes; fused by XLA.
    x_tm = jnp.transpose(x, (1, 0, 2)).reshape(T * B, D)

    # Fold the two RNN biases.
    bias = params["b_ih"] + params["b_hh"]                                   # (1, H)

    # Fold the activation-free FC chain fc1->fc2->fc3->fc4 into one (H, O) affine map.
    # Mathematically identical up to f32 rounding; computed once per call by XLA.
    w_fc = params["w1"] @ params["w2"] @ params["w3"] @ params["w4"]         # (H, O)
    b_fc = ((params["b1"] @ params["w2"] + params["b2"]) @ params["w3"]
            + params["b3"]) @ params["w4"] + params["b4"]                    # (1, O)
    O = w_fc.shape[1]

    vmem_spec = pl.BlockSpec(memory_space=pltpu.MemorySpace.VMEM)
    kernel = functools.partial(_rnn_fc_kernel, B=B, T=T)

    return pl.pallas_call(
        kernel,
        out_shape=jax.ShapeDtypeStruct((B, O), jnp.float32),
        in_specs=[vmem_spec] * 6,
        out_specs=vmem_spec,
    )(x_tm, params["w_ih"], params["w_hh"], bias, w_fc, b_fc)


def init_params(key, input_size, hidden_size, output_size):
    """Deterministic synthetic parameters matching nn.RNN / nn.Linear shapes.

    PyTorch stores Linear / RNN weights as (out_features, in_features); here they are
    kept pre-transposed to (in, out) so the kernel computes plain `act @ W + b`.
    Biases are (1, out) row vectors so they broadcast over the batch.
    """
    half = input_size // 2
    ks = jax.random.split(key, 12)
    scale = 0.1

    def w(k, in_dim, out_dim):
        return (scale * jax.random.normal(k, (in_dim, out_dim))).astype(jnp.float32)

    def b(k, out_dim):
        return (scale * jax.random.normal(k, (1, out_dim))).astype(jnp.float32)

    return {
        # RNN cell: h_t = tanh(x W_ih + b_ih + h_{t-1} W_hh + b_hh)
        "w_ih": w(ks[0], input_size, hidden_size),
        "w_hh": w(ks[1], hidden_size, hidden_size),
        "b_ih": b(ks[2], hidden_size),
        "b_hh": b(ks[3], hidden_size),
        # fc1: hidden -> input_size
        "w1": w(ks[4], hidden_size, input_size),
        "b1": b(ks[5], input_size),
        # fc2: input_size -> input_size//2
        "w2": w(ks[6], input_size, half),
        "b2": b(ks[7], half),
        # fc3: input_size//2 -> 5
        "w3": w(ks[8], half, 5),
        "b3": b(ks[9], 5),
        # fc4: 5 -> output_size
        "w4": w(ks[10], 5, output_size),
        "b4": b(ks[11], output_size),
    }


def reference_forward(x, p):
    """Pure-JAX reference mirroring PyTorch SimpleRNN.forward semantics."""
    B, T, D = x.shape
    H = p["w_hh"].shape[0]
    h = jnp.zeros((B, H), jnp.float32)
    for t in range(T):
        h = jnp.tanh(x[:, t, :] @ p["w_ih"] + p["b_ih"] + h @ p["w_hh"] + p["b_hh"])
    o = h @ p["w1"] + p["b1"]
    o = o @ p["w2"] + p["b2"]
    o = o @ p["w3"] + p["b3"]
    o = o @ p["w4"] + p["b4"]
    return o


if __name__ == "__main__":
    input_size, hidden_size, output_size = 16, 32, 2
    batch, seq = 2, 8

    key = jax.random.PRNGKey(0)
    k_x, k_p = jax.random.split(key)

    x = jax.random.normal(k_x, (batch, seq, input_size), dtype=jnp.float32)
    params = init_params(k_p, input_size, hidden_size, output_size)

    out = simple_rnn_forward(x, params)
    out = jax.block_until_ready(out)

    ref = reference_forward(x, params)
    assert out.shape == (batch, output_size)
    assert jnp.allclose(out, ref, atol=1e-5, rtol=1e-5), (out, ref)

    print("KERNEL_OK")
</pallas_src>

<mosaic_0001>
module attributes {stable_mosaic.version = 11 : i64} {
  func.func @_rnn_fc_kernel(%arg0: memref<16x16xf32, #tpu.memory_space<vmem>>, %arg1: memref<16x32xf32, #tpu.memory_space<vmem>>, %arg2: memref<32x32xf32, #tpu.memory_space<vmem>>, %arg3: memref<1x32xf32, #tpu.memory_space<vmem>>, %arg4: memref<32x2xf32, #tpu.memory_space<vmem>>, %arg5: memref<1x2xf32, #tpu.memory_space<vmem>>, %arg6: memref<2x2xf32, #tpu.memory_space<vmem>>) attributes {dimension_semantics = [], scalar_prefetch = 0 : i64, scratch_operands = 0 : i64, tpu.core_type = #tpu.core_type<tc>} {
    %c0 = arith.constant 0 : index
    %c0_0 = arith.constant 0 : index
    %0 = vector.load %arg2[%c0, %c0_0] : memref<32x32xf32, #tpu.memory_space<vmem>>, vector<32x32xf32>
    %c0_1 = arith.constant 0 : index
    %c0_2 = arith.constant 0 : index
    %1 = vector.load %arg0[%c0_1, %c0_2] : memref<16x16xf32, #tpu.memory_space<vmem>>, vector<16x16xf32>
    %c0_3 = arith.constant 0 : index
    %c0_4 = arith.constant 0 : index
    %2 = vector.load %arg1[%c0_3, %c0_4] : memref<16x32xf32, #tpu.memory_space<vmem>>, vector<16x32xf32>
    %cst = arith.constant dense<0.000000e+00> : vector<16x32xf32>
    %3 = tpu.matmul %1, %2, %cst {dimension_numbers = #tpu.dot_dimension_numbers<[1], [0], [0], [1], [0, 0, 1, 1], [], []>} : vector<16x16xf32>, vector<16x32xf32>, vector<16x32xf32> -> vector<16x32xf32>
    %c0_5 = arith.constant 0 : index
    %c0_6 = arith.constant 0 : index
    %4 = vector.load %arg3[%c0_5, %c0_6] : memref<1x32xf32, #tpu.memory_space<vmem>>, vector<1x32xf32>
    %5 = vector.broadcast %4 : vector<1x32xf32> to vector<16x32xf32>
    %6 = arith.addf %3, %5 : vector<16x32xf32>
    %7 = vector.extract_strided_slice %6 {offsets = [0, 0], sizes = [2, 32], strides = [1, 1]} : vector<16x32xf32> to vector<2x32xf32>
    %8 = math.tanh %7 : vector<2x32xf32>
    %9 = vector.extract_strided_slice %6 {offsets = [2, 0], sizes = [2, 32], strides = [1, 1]} : vector<16x32xf32> to vector<2x32xf32>
    %cst_7 = arith.constant dense<0.000000e+00> : vector<2x32xf32>
    %10 = tpu.matmul %8, %0, %cst_7 {dimension_numbers = #tpu.dot_dimension_numbers<[1], [0], [0], [1], [0, 0, 1, 1], [], []>} : vector<2x32xf32>, vector<32x32xf32>, vector<2x32xf32> -> vector<2x32xf32>
    %11 = arith.addf %9, %10 : vector<2x32xf32>
    %12 = math.tanh %11 : vector<2x32xf32>
    %13 = vector.extract_strided_slice %6 {offsets = [4, 0], sizes = [2, 32], strides = [1, 1]} : vector<16x32xf32> to vector<2x32xf32>
    %cst_8 = arith.constant dense<0.000000e+00> : vector<2x32xf32>
    %14 = tpu.matmul %12, %0, %cst_8 {dimension_numbers = #tpu.dot_dimension_numbers<[1], [0], [0], [1], [0, 0, 1, 1], [], []>} : vector<2x32xf32>, vector<32x32xf32>, vector<2x32xf32> -> vector<2x32xf32>
    %15 = arith.addf %13, %14 : vector<2x32xf32>
    %16 = math.tanh %15 : vector<2x32xf32>
    %17 = vector.extract_strided_slice %6 {offsets = [6, 0], sizes = [2, 32], strides = [1, 1]} : vector<16x32xf32> to vector<2x32xf32>
    %cst_9 = arith.constant dense<0.000000e+00> : vector<2x32xf32>
    %18 = tpu.matmul %16, %0, %cst_9 {dimension_numbers = #tpu.dot_dimension_numbers<[1], [0], [0], [1], [0, 0, 1, 1], [], []>} : vector<2x32xf32>, vector<32x32xf32>, vector<2x32xf32> -> vector<2x32xf32>
    %19 = arith.addf %17, %18 : vector<2x32xf32>
    %20 = math.tanh %19 : vector<2x32xf32>
    %21 = vector.extract_strided_slice %6 {offsets = [8, 0], sizes = [2, 32], strides = [1, 1]} : vector<16x32xf32> to vector<2x32xf32>
    %cst_10 = arith.constant dense<0.000000e+00> : vector<2x32xf32>
    %22 = tpu.matmul %20, %0, %cst_10 {dimension_numbers = #tpu.dot_dimension_numbers<[1], [0], [0], [1], [0, 0, 1, 1], [], []>} : vector<2x32xf32>, vector<32x32xf32>, vector<2x32xf32> -> vector<2x32xf32>
    %23 = arith.addf %21, %22 : vector<2x32xf32>
    %24 = math.tanh %23 : vector<2x32xf32>
    %25 = vector.extract_strided_slice %6 {offsets = [10, 0], sizes = [2, 32], strides = [1, 1]} : vector<16x32xf32> to vector<2x32xf32>
    %cst_11 = arith.constant dense<0.000000e+00> : vector<2x32xf32>
    %26 = tpu.matmul %24, %0, %cst_11 {dimension_numbers = #tpu.dot_dimension_numbers<[1], [0], [0], [1], [0, 0, 1, 1], [], []>} : vector<2x32xf32>, vector<32x32xf32>, vector<2x32xf32> -> vector<2x32xf32>
    %27 = arith.addf %25, %26 : vector<2x32xf32>
    %28 = math.tanh %27 : vector<2x32xf32>
    %29 = vector.extract_strided_slice %6 {offsets = [12, 0], sizes = [2, 32], strides = [1, 1]} : vector<16x32xf32> to vector<2x32xf32>
    %cst_12 = arith.constant dense<0.000000e+00> : vector<2x32xf32>
    %30 = tpu.matmul %28, %0, %cst_12 {dimension_numbers = #tpu.dot_dimension_numbers<[1], [0], [0], [1], [0, 0, 1, 1], [], []>} : vector<2x32xf32>, vector<32x32xf32>, vector<2x32xf32> -> vector<2x32xf32>
    %31 = arith.addf %29, %30 : vector<2x32xf32>
    %32 = math.tanh %31 : vector<2x32xf32>
    %33 = vector.extract_strided_slice %6 {offsets = [14, 0], sizes = [2, 32], strides = [1, 1]} : vector<16x32xf32> to vector<2x32xf32>
    %cst_13 = arith.constant dense<0.000000e+00> : vector<2x32xf32>
    %34 = tpu.matmul %32, %0, %cst_13 {dimension_numbers = #tpu.dot_dimension_numbers<[1], [0], [0], [1], [0, 0, 1, 1], [], []>} : vector<2x32xf32>, vector<32x32xf32>, vector<2x32xf32> -> vector<2x32xf32>
    %35 = arith.addf %33, %34 : vector<2x32xf32>
    %36 = math.tanh %35 : vector<2x32xf32>
    %c0_14 = arith.constant 0 : index
    %c0_15 = arith.constant 0 : index
    %37 = vector.load %arg4[%c0_14, %c0_15] : memref<32x2xf32, #tpu.memory_space<vmem>>, vector<32x2xf32>
    %cst_16 = arith.constant dense<0.000000e+00> : vector<2x2xf32>
    %38 = tpu.matmul %36, %37, %cst_16 {dimension_numbers = #tpu.dot_dimension_numbers<[1], [0], [0], [1], [0, 0, 1, 1], [], []>} : vector<2x32xf32>, vector<32x2xf32>, vector<2x2xf32> -> vector<2x2xf32>
    %c0_17 = arith.constant 0 : index
    %c0_18 = arith.constant 0 : index
    %39 = vector.load %arg5[%c0_17, %c0_18] : memref<1x2xf32, #tpu.memory_space<vmem>>, vector<1x2xf32>
    %40 = vector.broadcast %39 : vector<1x2xf32> to vector<2x2xf32>
    %41 = arith.addf %38, %40 : vector<2x2xf32>
    %c0_19 = arith.constant 0 : index
    %c0_20 = arith.constant 0 : index
    %42 = vector.load %arg6[%c0_19, %c0_20] : memref<2x2xf32, #tpu.memory_space<vmem>>, vector<2x2xf32>
    tpu.vector_store %arg6[%c0_19, %c0_20], %41 {strides = array<i32>} : memref<2x2xf32, #tpu.memory_space<vmem>>, vector<2x2xf32>,
    return
  }
}

</mosaic_0001>

<llo_original>
// kernel: simple_rnn_forward.1
$region0: #{simple_rnn_forward.1}
  #allocation0 [shape = 'u32[]', space=smem, size = 0x4, offset = 0x4, fixed_abs, tag = 'smem constant byte address 0x4 - core index']
  #allocation1 [shape = 'u32[144,128]{1,0:T(1,128)}', space=vmem, size = 0x12000, scoped, tag = 'internal scratch']
  %s0 = inlined_call_operand.vmem [shape: f32[16,16], index: 0, kind: input, shape index: {}]
  %s1 = inlined_call_operand.vmem [shape: f32[16,32], index: 1, kind: input, shape index: {}]
  %s2 = inlined_call_operand.vmem [shape: f32[32,32], index: 2, kind: input, shape index: {}]
  %s3 = inlined_call_operand.vmem [shape: f32[1,32], index: 3, kind: input, shape index: {}]
  %s4 = inlined_call_operand.vmem [shape: f32[32,2], index: 4, kind: input, shape index: {}]
  %s5 = inlined_call_operand.vmem [shape: f32[1,2], index: 5, kind: input, shape index: {}]
  %s6 = inlined_call_operand.hbm [shape: f32[2,2], index: 6, kind: output, shape index: {}]
  %s7 = sld [smem:[#allocation0]]
  $region34: #{simple_rnn_forward.1} parent=0
    _
  %s9 = ssub.s32 1, %s7
  %s10 = scalar_select 0, %s9, %s7
  $region1: #{simple_rnn_forward.1} parent=0
    #allocation2 [shape = 'u8[1024]{0}', space=vmem, size = 0x400, scoped, tag = 'output window, operand 0, single buffered']
    #allocation3 [shape = 's32[1]{0}', space=sflag, size = 0x4, scoped, tag = 'scoped memory for simple_rnn_forward.1']
    %11 = vsyncpa [#allocation3], 0
    // Predicated region
    $region2: #{simple_rnn_forward.1} parent=1 // pred_check
      _
    $region3: #{simple_rnn_forward.1} parent=1 // pred_check_branch
      %13 = sbr.rel (0) target = $region5
    $region4: #{simple_rnn_forward.1} parent=1 // pred_region
      _
    $region5: #{simple_rnn_forward.1} parent=1 // pred_fallthru
      _
    // Predicated region
    $region6: #{simple_rnn_forward.1} parent=1 // pred_check
      _
    $region7: #{simple_rnn_forward.1} parent=1 // pred_check_branch
      %15 = sbr.rel (0) target = $region9
    $region8: #{simple_rnn_forward.1} parent=1 // pred_region
      _
    $region9: #{simple_rnn_forward.1} parent=1 // pred_fallthru
      _
    // Predicated region
    $region10: #{simple_rnn_forward.1} parent=1 // pred_check
      _
    $region11: #{simple_rnn_forward.1} parent=1 // pred_check_branch
      %17 = sbr.rel (0) target = $region13
    $region12: #{simple_rnn_forward.1} parent=1 // pred_region
      _
    $region13: #{simple_rnn_forward.1} parent=1 // pred_fallthru
      _
    // Predicated region
    $region14: #{simple_rnn_forward.1} parent=1 // pred_check
      _
    $region15: #{simple_rnn_forward.1} parent=1 // pred_check_branch
      %19 = sbr.rel (0) target = $region17
    $region16: #{simple_rnn_forward.1} parent=1 // pred_region
      _
    $region17: #{simple_rnn_forward.1} parent=1 // pred_fallthru
      _
    // Predicated region
    $region18: #{simple_rnn_forward.1} parent=1 // pred_check
      _
    $region19: #{simple_rnn_forward.1} parent=1 // pred_check_branch
      %21 = sbr.rel (0) target = $region21
    $region20: #{simple_rnn_forward.1} parent=1 // pred_region
      _
    $region21: #{simple_rnn_forward.1} parent=1 // pred_fallthru
      _
    // Predicated region
    $region22: #{simple_rnn_forward.1} parent=1 // pred_check
      _
    $region23: #{simple_rnn_forward.1} parent=1 // pred_check_branch
      %23 = sbr.rel (0) target = $region25
    $region24: #{simple_rnn_forward.1} parent=1 // pred_region
      _
    $region25: #{simple_rnn_forward.1} parent=1 // pred_fallthru
      _
    %v24 = vld [vmem:[%s2] sm:$0xff]
    %v25 = vld [vmem:[%s2 + $0x8] sm:$0xff]
    %v26 = vld [vmem:[%s2 + $0x10] sm:$0xff]
    %v27 = vld [vmem:[%s2 + $0x18] sm:$0xff]
    %v28 = vld [vmem:[%s0] sm:$0xff]
    %v29 = vld [vmem:[%s0 + $0x8] sm:$0xff]
    %v30 = vld [vmem:[%s1] sm:$0xff]
    %v31 = vld [vmem:[%s1 + $0x8] sm:$0xff]
    %v32 = vld [vmem:[%s3] sm:$0x1]
    %v34 = vlaneseq
    %v35 = vshrl.u32 %v34, 7
    %v36 = vsub.s32 0, %v35
    %v37 = vrot.slane %v32, %v36
    %vm39 = vcmask 130048
    %v41 = vsel %vm39, %v28, 0
    %v44 = vsel %vm39, %v29, 0
    %46 = vmatprep.subr.mxu0 0.0
    %47 = vmatpush1.msra.mxu0 0.0
    %48 = vmatprep.subr.mxu0 0.0
    %49 = vmatpush1.msra.mxu0 0.0
    %50 = vmatprep.subr.mxu0 0.0
    %51 = vmatpush1.msra.mxu0 0.0
    %52 = vmatprep.subr.mxu0 0.0
    %53 = vmatpush1.msra.mxu0 0.0
    %54 = vmatprep.subr.mxu0 0.0
    %55 = vmatpush1.msra.mxu0 0.0
    %56 = vmatprep.subr.mxu0 0.0
    %57 = vmatpush1.msra.mxu0 0.0
    %58 = vmatprep.subr.mxu0 0.0
    %59 = vmatpush1.msra.mxu0 0.0
    %60 = vmatprep.subr.mxu0 0.0
    %61 = vmatpush1.msra.mxu0 0.0
    %62 = vmatprep.subr.mxu0 0.0
    %63 = vmatpush1.msra.mxu0 0.0
    %64 = vmatprep.subr.mxu0 0.0
    %65 = vmatpush1.msra.mxu0 0.0
    %66 = vmatprep.subr.mxu0 0.0
    %67 = vmatpush1.msra.mxu0 0.0
    %68 = vmatprep.subr.mxu0 0.0
    %69 = vmatpush1.msra.mxu0 0.0
    %70 = vmatprep.subr.mxu0 0.0
    %71 = vmatpush1.msra.mxu0 0.0
    %72 = vmatprep.subr.mxu0 0.0
    %73 = vmatpush1.msra.mxu0 0.0
    %74 = vmatprep.subr.mxu0 0.0
    %75 = vmatpush1.msra.mxu0 %v31
    %76 = vmatprep.subr.mxu0 0.0
    %77 = vmatpush1.msra.mxu0 %v30
    %78 = vmatprep.subr.mxu0 0.0
    %79 = vmatpush2.msra.mxu0 0.0
    %80 = vmatprep.subr.mxu0 0.0
    %81 = vmatpush2.msra.mxu0 0.0
    %82 = vmatprep.subr.mxu0 0.0
    %83 = vmatpush2.msra.mxu0 0.0
    %84 = vmatprep.subr.mxu0 0.0
    %85 = vmatpush2.msra.mxu0 0.0
    %86 = vmatprep.subr.mxu0 0.0
    %87 = vmatpush2.msra.mxu0 0.0
    %88 = vmatprep.subr.mxu0 0.0
    %89 = vmatpush2.msra.mxu0 0.0
    %90 = vmatprep.subr.mxu0 0.0
    %91 = vmatpush2.msra.mxu0 0.0
    %92 = vmatprep.subr.mxu0 0.0
    %93 = vmatpush2.msra.mxu0 0.0
    %94 = vmatprep.subr.mxu0 0.0
    %95 = vmatpush2.msra.mxu0 0.0
    %96 = vmatprep.subr.mxu0 0.0
    %97 = vmatpush2.msra.mxu0 0.0
    %98 = vmatprep.subr.mxu0 0.0
    %99 = vmatpush2.msra.mxu0 0.0
    %100 = vmatprep.subr.mxu0 0.0
    %101 = vmatpush2.msra.mxu0 0.0
    %102 = vmatprep.subr.mxu0 0.0
    %103 = vmatpush2.msra.mxu0 0.0
    %104 = vmatprep.subr.mxu0 0.0
    %105 = vmatpush2.msra.mxu0 0.0
    %106 = vmatprep.subr.mxu0 0.0
    %107 = vmatpush2.msra.mxu0 0.0
    %108 = vmatprep.subr.mxu0 0.0
    %109 = vmatpush2.msra.mxu0 0.0
    %110 = vmatprep.mubr.f32.mxu0 0.0
    %111 = vmatmul.mubr.f32.gmra.mxu0 %v41
    %v112 = vpop.f32.mrf.mxu0
    %v113 = vadd.f32 %v37, %v112
    %v114 = vpop.f32.mrf.mxu0
    %115 = vmatprep.mubr.f32.mxu0 0.0
    %116 = vmatmul.mubr.f32.gmra.mxu0 %v44
    %v117 = vpop.f32.mrf.mxu0
    %v118 = vadd.f32 %v37, %v117
    %v119 = vpop.f32.mrf.mxu0
    %120 = vdwg.mxu0
    %v121 = vtanh.pop %v113
    %vm122 = vcmask 261120
    %v124 = vsel %vm122, %v121, 0
    %126 = vmatprep.subr.mxu0 0.0
    %127 = vmatpush1.msra.mxu0 0.0
    %128 = vmatprep.subr.mxu0 0.0
    %129 = vmatpush1.msra.mxu0 0.0
    %130 = vmatprep.subr.mxu0 0.0
    %131 = vmatpush1.msra.mxu0 0.0
    %132 = vmatprep.subr.mxu0 0.0
    %133 = vmatpush1.msra.mxu0 0.0
    %134 = vmatprep.subr.mxu0 0.0
    %135 = vmatpush1.msra.mxu0 0.0
    %136 = vmatprep.subr.mxu0 0.0
    %137 = vmatpush1.msra.mxu0 0.0
    %138 = vmatprep.subr.mxu0 0.0
    %139 = vmatpush1.msra.mxu0 0.0
    %140 = vmatprep.subr.mxu0 0.0
    %141 = vmatpush1.msra.mxu0 0.0
    %142 = vmatprep.subr.mxu0 0.0
    %143 = vmatpush1.msra.mxu0 0.0
    %144 = vmatprep.subr.mxu0 0.0
    %145 = vmatpush1.msra.mxu0 0.0
    %146 = vmatprep.subr.mxu0 0.0
    %147 = vmatpush1.msra.mxu0 0.0
    %148 = vmatprep.subr.mxu0 0.0
    %149 = vmatpush1.msra.mxu0 0.0
    %150 = vmatprep.subr.mxu0 0.0
    %151 = vmatpush1.msra.mxu0 %v27
    %152 = vmatprep.subr.mxu0 0.0
    %153 = vmatpush1.msra.mxu0 %v26
    %154 = vmatprep.subr.mxu0 0.0
    %155 = vmatpush1.msra.mxu0 %v25
    %156 = vmatprep.subr.mxu0 0.0
    %157 = vmatpush1.msra.mxu0 %v24
    %158 = vmatprep.subr.mxu0 0.0
    %159 = vmatpush2.msra.mxu0 0.0
    %160 = vmatprep.subr.mxu0 0.0
    %161 = vmatpush2.msra.mxu0 0.0
    %162 = vmatprep.subr.mxu0 0.0
    %163 = vmatpush2.msra.mxu0 0.0
    %164 = vmatprep.subr.mxu0 0.0
    %165 = vmatpush2.msra.mxu0 0.0
    %166 = vmatprep.subr.mxu0 0.0
    %167 = vmatpush2.msra.mxu0 0.0
    %168 = vmatprep.subr.mxu0 0.0
    %169 = vmatpush2.msra.mxu0 0.0
    %170 = vmatprep.subr.mxu0 0.0
    %171 = vmatpush2.msra.mxu0 0.0
    %172 = vmatprep.subr.mxu0 0.0
    %173 = vmatpush2.msra.mxu0 0.0
    %174 = vmatprep.subr.mxu0 0.0
    %175 = vmatpush2.msra.mxu0 0.0
    %176 = vmatprep.subr.mxu0 0.0
    %177 = vmatpush2.msra.mxu0 0.0
    %178 = vmatprep.subr.mxu0 0.0
    %179 = vmatpush2.msra.mxu0 0.0
    %180 = vmatprep.subr.mxu0 0.0
    %181 = vmatpush2.msra.mxu0 0.0
    %182 = vmatprep.subr.mxu0 0.0
    %183 = vmatpush2.msra.mxu0 0.0
    %184 = vmatprep.subr.mxu0 0.0
    %185 = vmatpush2.msra.mxu0 0.0
    %186 = vmatprep.subr.mxu0 0.0
    %187 = vmatpush2.msra.mxu0 0.0
    %188 = vmatprep.subr.mxu0 0.0
    %189 = vmatpush2.msra.mxu0 0.0
    %190 = vmatprep.mubr.f32.mxu0 0.0
    %191 = vmatmul.mubr.f32.gmra.mxu0 %v124
    %v192 = vpop.f32.mrf.mxu0
    %v193 = vadd.f32 0.0, %v192
    %v194 = vpop.f32.mrf.mxu0
    %195 = vdwg.mxu0
    %v197 = vrot.slane %v193, 6
    %v199 = vadd.f32 %v113, %v197
    %v200 = vtanh.pop %v199
    %v202 = vrot.slane %v200, 2
    %v203 = vsel %vm122, %v202, 0
    %205 = vmatprep.subr.mxu0 0.0
    %206 = vmatpush1.msra.mxu0 0.0
    %207 = vmatprep.subr.mxu0 0.0
    %208 = vmatpush1.msra.mxu0 0.0
    %209 = vmatprep.subr.mxu0 0.0
    %210 = vmatpush1.msra.mxu0 0.0
    %211 = vmatprep.subr.mxu0 0.0
    %212 = vmatpush1.msra.mxu0 0.0
    %213 = vmatprep.subr.mxu0 0.0
    %214 = vmatpush1.msra.mxu0 0.0
    %215 = vmatprep.subr.mxu0 0.0
    %216 = vmatpush1.msra.mxu0 0.0
    %217 = vmatprep.subr.mxu0 0.0
    %218 = vmatpush1.msra.mxu0 0.0
    %219 = vmatprep.subr.mxu0 0.0
    %220 = vmatpush1.msra.mxu0 0.0
    %221 = vmatprep.subr.mxu0 0.0
    %222 = vmatpush1.msra.mxu0 0.0
    %223 = vmatprep.subr.mxu0 0.0
    %224 = vmatpush1.msra.mxu0 0.0
    %225 = vmatprep.subr.mxu0 0.0
    %226 = vmatpush1.msra.mxu0 0.0
    %227 = vmatprep.subr.mxu0 0.0
    %228 = vmatpush1.msra.mxu0 0.0
    %229 = vmatprep.subr.mxu0 0.0
    %230 = vmatpush1.msra.mxu0 %v27
    %231 = vmatprep.subr.mxu0 0.0
    %232 = vmatpush1.msra.mxu0 %v26
    %233 = vmatprep.subr.mxu0 0.0
    %234 = vmatpush1.msra.mxu0 %v25
    %235 = vmatprep.subr.mxu0 0.0
    %236 = vmatpush1.msra.mxu0 %v24
    %237 = vmatprep.subr.mxu0 0.0
    %238 = vmatpush2.msra.mxu0 0.0
    %239 = vmatprep.subr.mxu0 0.0
    %240 = vmatpush2.msra.mxu0 0.0
    %241 = vmatprep.subr.mxu0 0.0
    %242 = vmatpush2.msra.mxu0 0.0
    %243 = vmatprep.subr.mxu0 0.0
    %244 = vmatpush2.msra.mxu0 0.0
    %245 = vmatprep.subr.mxu0 0.0
    %246 = vmatpush2.msra.mxu0 0.0
    %247 = vmatprep.subr.mxu0 0.0
    %248 = vmatpush2.msra.mxu0 0.0
    %249 = vmatprep.subr.mxu0 0.0
    %250 = vmatpush2.msra.mxu0 0.0
    %251 = vmatprep.subr.mxu0 0.0
    %252 = vmatpush2.msra.mxu0 0.0
    %253 = vmatprep.subr.mxu0 0.0
    %254 = vmatpush2.msra.mxu0 0.0
    %255 = vmatprep.subr.mxu0 0.0
    %256 = vmatpush2.msra.mxu0 0.0
    %257 = vmatprep.subr.mxu0 0.0
    %258 = vmatpush2.msra.mxu0 0.0
    %259 = vmatprep.subr.mxu0 0.0
    %260 = vmatpush2.msra.mxu0 0.0
    %261 = vmatprep.subr.mxu0 0.0
    %262 = vmatpush2.msra.mxu0 0.0
    %263 = vmatprep.subr.mxu0 0.0
    %264 = vmatpush2.msra.mxu0 0.0
    %265 = vmatprep.subr.mxu0 0.0
    %266 = vmatpush2.msra.mxu0 0.0
    %267 = vmatprep.subr.mxu0 0.0
    %268 = vmatpush2.msra.mxu0 0.0
    %269 = vmatprep.mubr.f32.mxu0 0.0
    %270 = vmatmul.mubr.f32.gmra.mxu0 %v203
    %v271 = vpop.f32.mrf.mxu0
    %v272 = vadd.f32 0.0, %v271
    %v273 = vpop.f32.mrf.mxu0
    %274 = vdwg.mxu0
    %v276 = vrot.slane %v272, 4
    %v278 = vadd.f32 %v113, %v276
    %v279 = vtanh.pop %v278
    %v281 = vrot.slane %v279, 4
    %v282 = vsel %vm122, %v281, 0
    %284 = vmatprep.subr.mxu0 0.0
    %285 = vmatpush1.msra.mxu0 0.0
    %286 = vmatprep.subr.mxu0 0.0
    %287 = vmatpush1.msra.mxu0 0.0
    %288 = vmatprep.subr.mxu0 0.0
    %289 = vmatpush1.msra.mxu0 0.0
    %290 = vmatprep.subr.mxu0 0.0
    %291 = vmatpush1.msra.mxu0 0.0
    %292 = vmatprep.subr.mxu0 0.0
    %293 = vmatpush1.msra.mxu0 0.0
    %294 = vmatprep.subr.mxu0 0.0
    %295 = vmatpush1.msra.mxu0 0.0
    %296 = vmatprep.subr.mxu0 0.0
    %297 = vmatpush1.msra.mxu0 0.0
    %298 = vmatprep.subr.mxu0 0.0
    %299 = vmatpush1.msra.mxu0 0.0
    %300 = vmatprep.subr.mxu0 0.0
    %301 = vmatpush1.msra.mxu0 0.0
    %302 = vmatprep.subr.mxu0 0.0
    %303 = vmatpush1.msra.mxu0 0.0
    %304 = vmatprep.subr.mxu0 0.0
    %305 = vmatpush1.msra.mxu0 0.0
    %306 = vmatprep.subr.mxu0 0.0
    %307 = vmatpush1.msra.mxu0 0.0
    %308 = vmatprep.subr.mxu0 0.0
    %309 = vmatpush1.msra.mxu0 %v27
    %310 = vmatprep.subr.mxu0 0.0
    %311 = vmatpush1.msra.mxu0 %v26
    %312 = vmatprep.subr.mxu0 0.0
    %313 = vmatpush1.msra.mxu0 %v25
    %314 = vmatprep.subr.mxu0 0.0
    %315 = vmatpush1.msra.mxu0 %v24
    %316 = vmatprep.subr.mxu0 0.0
    %317 = vmatpush2.msra.mxu0 0.0
    %318 = vmatprep.subr.mxu0 0.0
    %319 = vmatpush2.msra.mxu0 0.0
    %320 = vmatprep.subr.mxu0 0.0
    %321 = vmatpush2.msra.mxu0 0.0
    %322 = vmatprep.subr.mxu0 0.0
    %323 = vmatpush2.msra.mxu0 0.0
    %324 = vmatprep.subr.mxu0 0.0
    %325 = vmatpush2.msra.mxu0 0.0
    %326 = vmatprep.subr.mxu0 0.0
    %327 = vmatpush2.msra.mxu0 0.0
    %328 = vmatprep.subr.mxu0 0.0
    %329 = vmatpush2.msra.mxu0 0.0
    %330 = vmatprep.subr.mxu0 0.0
    %331 = vmatpush2.msra.mxu0 0.0
    %332 = vmatprep.subr.mxu0 0.0
    %333 = vmatpush2.msra.mxu0 0.0
    %334 = vmatprep.subr.mxu0 0.0
    %335 = vmatpush2.msra.mxu0 0.0
    %336 = vmatprep.subr.mxu0 0.0
    %337 = vmatpush2.msra.mxu0 0.0
    %338 = vmatprep.subr.mxu0 0.0
    %339 = vmatpush2.msra.mxu0 0.0
    %340 = vmatprep.subr.mxu0 0.0
    %341 = vmatpush2.msra.mxu0 0.0
    %342 = vmatprep.subr.mxu0 0.0
    %343 = vmatpush2.msra.mxu0 0.0
    %344 = vmatprep.subr.mxu0 0.0
    %345 = vmatpush2.msra.mxu0 0.0
    %346 = vmatprep.subr.mxu0 0.0
    %347 = vmatpush2.msra.mxu0 0.0
    %348 = vmatprep.mubr.f32.mxu0 0.0
    %349 = vmatmul.mubr.f32.gmra.mxu0 %v282
    %v350 = vpop.f32.mrf.mxu0
    %v351 = vadd.f32 0.0, %v350
    %v352 = vpop.f32.mrf.mxu0
    %353 = vdwg.mxu0
    %v355 = vrot.slane %v351, 2
    %v357 = vadd.f32 %v113, %v355
    %v358 = vtanh.pop %v357
    %v360 = vrot.slane %v358, 6
    %v361 = vsel %vm122, %v360, 0
    %363 = vmatprep.subr.mxu0 0.0
    %364 = vmatpush1.msra.mxu0 0.0
    %365 = vmatprep.subr.mxu0 0.0
    %366 = vmatpush1.msra.mxu0 0.0
    %367 = vmatprep.subr.mxu0 0.0
    %368 = vmatpush1.msra.mxu0 0.0
    %369 = vmatprep.subr.mxu0 0.0
    %370 = vmatpush1.msra.mxu0 0.0
    %371 = vmatprep.subr.mxu0 0.0
    %372 = vmatpush1.msra.mxu0 0.0
    %373 = vmatprep.subr.mxu0 0.0
    %374 = vmatpush1.msra.mxu0 0.0
    %375 = vmatprep.subr.mxu0 0.0
    %376 = vmatpush1.msra.mxu0 0.0
    %377 = vmatprep.subr.mxu0 0.0
    %378 = vmatpush1.msra.mxu0 0.0
    %379 = vmatprep.subr.mxu0 0.0
    %380 = vmatpush1.msra.mxu0 0.0
    %381 = vmatprep.subr.mxu0 0.0
    %382 = vmatpush1.msra.mxu0 0.0
    %383 = vmatprep.subr.mxu0 0.0
    %384 = vmatpush1.msra.mxu0 0.0
    %385 = vmatprep.subr.mxu0 0.0
    %386 = vmatpush1.msra.mxu0 0.0
    %387 = vmatprep.subr.mxu0 0.0
    %388 = vmatpush1.msra.mxu0 %v27
    %389 = vmatprep.subr.mxu0 0.0
    %390 = vmatpush1.msra.mxu0 %v26
    %391 = vmatprep.subr.mxu0 0.0
    %392 = vmatpush1.msra.mxu0 %v25
    %393 = vmatprep.subr.mxu0 0.0
    %394 = vmatpush1.msra.mxu0 %v24
    %395 = vmatprep.subr.mxu0 0.0
    %396 = vmatpush2.msra.mxu0 0.0
    %397 = vmatprep.subr.mxu0 0.0
    %398 = vmatpush2.msra.mxu0 0.0
    %399 = vmatprep.subr.mxu0 0.0
    %400 = vmatpush2.msra.mxu0 0.0
    %401 = vmatprep.subr.mxu0 0.0
    %402 = vmatpush2.msra.mxu0 0.0
    %403 = vmatprep.subr.mxu0 0.0
    %404 = vmatpush2.msra.mxu0 0.0
    %405 = vmatprep.subr.mxu0 0.0
    %406 = vmatpush2.msra.mxu0 0.0
    %407 = vmatprep.subr.mxu0 0.0
    %408 = vmatpush2.msra.mxu0 0.0
    %409 = vmatprep.subr.mxu0 0.0
    %410 = vmatpush2.msra.mxu0 0.0
    %411 = vmatprep.subr.mxu0 0.0
    %412 = vmatpush2.msra.mxu0 0.0
    %413 = vmatprep.subr.mxu0 0.0
    %414 = vmatpush2.msra.mxu0 0.0
    %415 = vmatprep.subr.mxu0 0.0
    %416 = vmatpush2.msra.mxu0 0.0
    %417 = vmatprep.subr.mxu0 0.0
    %418 = vmatpush2.msra.mxu0 0.0
    %419 = vmatprep.subr.mxu0 0.0
    %420 = vmatpush2.msra.mxu0 0.0
    %421 = vmatprep.subr.mxu0 0.0
    %422 = vmatpush2.msra.mxu0 0.0
    %423 = vmatprep.subr.mxu0 0.0
    %424 = vmatpush2.msra.mxu0 0.0
    %425 = vmatprep.subr.mxu0 0.0
    %426 = vmatpush2.msra.mxu0 0.0
    %427 = vmatprep.mubr.f32.mxu0 0.0
    %428 = vmatmul.mubr.f32.gmra.mxu0 %v361
    %v429 = vpop.f32.mrf.mxu0
    %v430 = vadd.f32 0.0, %v429
    %v431 = vpop.f32.mrf.mxu0
    %432 = vdwg.mxu0
    %v433 = vadd.f32 %v118, %v430
    %v434 = vtanh.pop %v433
    %v436 = vsel %vm122, %v434, 0
    %438 = vmatprep.subr.mxu0 0.0
    %439 = vmatpush1.msra.mxu0 0.0
    %440 = vmatprep.subr.mxu0 0.0
    %441 = vmatpush1.msra.mxu0 0.0
    %442 = vmatprep.subr.mxu0 0.0
    %443 = vmatpush1.msra.mxu0 0.0
    %444 = vmatprep.subr.mxu0 0.0
    %445 = vmatpush1.msra.mxu0 0.0
    %446 = vmatprep.subr.mxu0 0.0
    %447 = vmatpush1.msra.mxu0 0.0
    %448 = vmatprep.subr.mxu0 0.0
    %449 = vmatpush1.msra.mxu0 0.0
    %450 = vmatprep.subr.mxu0 0.0
    %451 = vmatpush1.msra.mxu0 0.0
    %452 = vmatprep.subr.mxu0 0.0
    %453 = vmatpush1.msra.mxu0 0.0
    %454 = vmatprep.subr.mxu0 0.0
    %455 = vmatpush1.msra.mxu0 0.0
    %456 = vmatprep.subr.mxu0 0.0
    %457 = vmatpush1.msra.mxu0 0.0
    %458 = vmatprep.subr.mxu0 0.0
    %459 = vmatpush1.msra.mxu0 0.0
    %460 = vmatprep.subr.mxu0 0.0
    %461 = vmatpush1.msra.mxu0 0.0
    %462 = vmatprep.subr.mxu0 0.0
    %463 = vmatpush1.msra.mxu0 %v27
    %464 = vmatprep.subr.mxu0 0.0
    %465 = vmatpush1.msra.mxu0 %v26
    %466 = vmatprep.subr.mxu0 0.0
    %467 = vmatpush1.msra.mxu0 %v25
    %468 = vmatprep.subr.mxu0 0.0
    %469 = vmatpush1.msra.mxu0 %v24
    %470 = vmatprep.subr.mxu0 0.0
    %471 = vmatpush2.msra.mxu0 0.0
    %472 = vmatprep.subr.mxu0 0.0
    %473 = vmatpush2.msra.mxu0 0.0
    %474 = vmatprep.subr.mxu0 0.0
    %475 = vmatpush2.msra.mxu0 0.0
    %476 = vmatprep.subr.mxu0 0.0
    %477 = vmatpush2.msra.mxu0 0.0
    %478 = vmatprep.subr.mxu0 0.0
    %479 = vmatpush2.msra.mxu0 0.0
    %480 = vmatprep.subr.mxu0 0.0
    %481 = vmatpush2.msra.mxu0 0.0
    %482 = vmatprep.subr.mxu0 0.0
    %483 = vmatpush2.msra.mxu0 0.0
    %484 = vmatprep.subr.mxu0 0.0
    %485 = vmatpush2.msra.mxu0 0.0
    %486 = vmatprep.subr.mxu0 0.0
    %487 = vmatpush2.msra.mxu0 0.0
    %488 = vmatprep.subr.mxu0 0.0
    %489 = vmatpush2.msra.mxu0 0.0
    %490 = vmatprep.subr.mxu0 0.0
    %491 = vmatpush2.msra.mxu0 0.0
    %492 = vmatprep.subr.mxu0 0.0
    %493 = vmatpush2.msra.mxu0 0.0
    %494 = vmatprep.subr.mxu0 0.0
    %495 = vmatpush2.msra.mxu0 0.0
    %496 = vmatprep.subr.mxu0 0.0
    %497 = vmatpush2.msra.mxu0 0.0
    %498 = vmatprep.subr.mxu0 0.0
    %499 = vmatpush2.msra.mxu0 0.0
    %500 = vmatprep.subr.mxu0 0.0
    %501 = vmatpush2.msra.mxu0 0.0
    %502 = vmatprep.mubr.f32.mxu0 0.0
    %503 = vmatmul.mubr.f32.gmra.mxu0 %v436
    %v504 = vpop.f32.mrf.mxu0
    %v505 = vadd.f32 0.0, %v504
    %v506 = vpop.f32.mrf.mxu0
    %507 = vdwg.mxu0
    %v509 = vrot.slane %v505, 6
    %v511 = vadd.f32 %v118, %v509
    %v512 = vtanh.pop %v511
    %v514 = vrot.slane %v512, 2
    %v515 = vsel %vm122, %v514, 0
    %517 = vmatprep.subr.mxu0 0.0
    %518 = vmatpush1.msra.mxu0 0.0
    %519 = vmatprep.subr.mxu0 0.0
    %520 = vmatpush1.msra.mxu0 0.0
    %521 = vmatprep.subr.mxu0 0.0
    %522 = vmatpush1.msra.mxu0 0.0
    %523 = vmatprep.subr.mxu0 0.0
    %524 = vmatpush1.msra.mxu0 0.0
    %525 = vmatprep.subr.mxu0 0.0
    %526 = vmatpush1.msra.mxu0 0.0
    %527 = vmatprep.subr.mxu0 0.0
    %528 = vmatpush1.msra.mxu0 0.0
    %529 = vmatprep.subr.mxu0 0.0
    %530 = vmatpush1.msra.mxu0 0.0
    %531 = vmatprep.subr.mxu0 0.0
    %532 = vmatpush1.msra.mxu0 0.0
    %533 = vmatprep.subr.mxu0 0.0
    %534 = vmatpush1.msra.mxu0 0.0
    %535 = vmatprep.subr.mxu0 0.0
    %536 = vmatpush1.msra.mxu0 0.0
    %537 = vmatprep.subr.mxu0 0.0
    %538 = vmatpush1.msra.mxu0 0.0
    %539 = vmatprep.subr.mxu0 0.0
    %540 = vmatpush1.msra.mxu0 0.0
    %541 = vmatprep.subr.mxu0 0.0
    %542 = vmatpush1.msra.mxu0 %v27
    %543 = vmatprep.subr.mxu0 0.0
    %544 = vmatpush1.msra.mxu0 %v26
    %545 = vmatprep.subr.mxu0 0.0
    %546 = vmatpush1.msra.mxu0 %v25
    %547 = vmatprep.subr.mxu0 0.0
    %548 = vmatpush1.msra.mxu0 %v24
    %549 = vmatprep.subr.mxu0 0.0
    %550 = vmatpush2.msra.mxu0 0.0
    %551 = vmatprep.subr.mxu0 0.0
    %552 = vmatpush2.msra.mxu0 0.0
    %553 = vmatprep.subr.mxu0 0.0
    %554 = vmatpush2.msra.mxu0 0.0
    %555 = vmatprep.subr.mxu0 0.0
    %556 = vmatpush2.msra.mxu0 0.0
    %557 = vmatprep.subr.mxu0 0.0
    %558 = vmatpush2.msra.mxu0 0.0
    %559 = vmatprep.subr.mxu0 0.0
    %560 = vmatpush2.msra.mxu0 0.0
    %561 = vmatprep.subr.mxu0 0.0
    %562 = vmatpush2.msra.mxu0 0.0
    %563 = vmatprep.subr.mxu0 0.0
    %564 = vmatpush2.msra.mxu0 0.0
    %565 = vmatprep.subr.mxu0 0.0
    %566 = vmatpush2.msra.mxu0 0.0
    %567 = vmatprep.subr.mxu0 0.0
    %568 = vmatpush2.msra.mxu0 0.0
    %569 = vmatprep.subr.mxu0 0.0
    %570 = vmatpush2.msra.mxu0 0.0
    %571 = vmatprep.subr.mxu0 0.0
    %572 = vmatpush2.msra.mxu0 0.0
    %573 = vmatprep.subr.mxu0 0.0
    %574 = vmatpush2.msra.mxu0 0.0
    %575 = vmatprep.subr.mxu0 0.0
    %576 = vmatpush2.msra.mxu0 0.0
    %577 = vmatprep.subr.mxu0 0.0
    %578 = vmatpush2.msra.mxu0 0.0
    %579 = vmatprep.subr.mxu0 0.0
    %580 = vmatpush2.msra.mxu0 0.0
    %581 = vmatprep.mubr.f32.mxu0 0.0
    %582 = vmatmul.mubr.f32.gmra.mxu0 %v515
    %v583 = vpop.f32.mrf.mxu0
    %v584 = vadd.f32 0.0, %v583
    %v585 = vpop.f32.mrf.mxu0
    %586 = vdwg.mxu0
    %v588 = vrot.slane %v584, 4
    %v590 = vadd.f32 %v118, %v588
    %v591 = vtanh.pop %v590
    %v593 = vrot.slane %v591, 4
    %v594 = vsel %vm122, %v593, 0
    %596 = vmatprep.subr.mxu0 0.0
    %597 = vmatpush1.msra.mxu0 0.0
    %598 = vmatprep.subr.mxu0 0.0
    %599 = vmatpush1.msra.mxu0 0.0
    %600 = vmatprep.subr.mxu0 0.0
    %601 = vmatpush1.msra.mxu0 0.0
    %602 = vmatprep.subr.mxu0 0.0
    %603 = vmatpush1.msra.mxu0 0.0
    %604 = vmatprep.subr.mxu0 0.0
    %605 = vmatpush1.msra.mxu0 0.0
    %606 = vmatprep.subr.mxu0 0.0
    %607 = vmatpush1.msra.mxu0 0.0
    %608 = vmatprep.subr.mxu0 0.0
    %609 = vmatpush1.msra.mxu0 0.0
    %610 = vmatprep.subr.mxu0 0.0
    %611 = vmatpush1.msra.mxu0 0.0
    %612 = vmatprep.subr.mxu0 0.0
    %613 = vmatpush1.msra.mxu0 0.0
    %614 = vmatprep.subr.mxu0 0.0
    %615 = vmatpush1.msra.mxu0 0.0
    %616 = vmatprep.subr.mxu0 0.0
    %617 = vmatpush1.msra.mxu0 0.0
    %618 = vmatprep.subr.mxu0 0.0
    %619 = vmatpush1.msra.mxu0 0.0
    %620 = vmatprep.subr.mxu0 0.0
    %621 = vmatpush1.msra.mxu0 %v27
    %622 = vmatprep.subr.mxu0 0.0
    %623 = vmatpush1.msra.mxu0 %v26
    %624 = vmatprep.subr.mxu0 0.0
    %625 = vmatpush1.msra.mxu0 %v25
    %626 = vmatprep.subr.mxu0 0.0
    %627 = vmatpush1.msra.mxu0 %v24
    %628 = vmatprep.subr.mxu0 0.0
    %629 = vmatpush2.msra.mxu0 0.0
    %630 = vmatprep.subr.mxu0 0.0
    %631 = vmatpush2.msra.mxu0 0.0
    %632 = vmatprep.subr.mxu0 0.0
    %633 = vmatpush2.msra.mxu0 0.0
    %634 = vmatprep.subr.mxu0 0.0
    %635 = vmatpush2.msra.mxu0 0.0
    %636 = vmatprep.subr.mxu0 0.0
    %637 = vmatpush2.msra.mxu0 0.0
    %638 = vmatprep.subr.mxu0 0.0
    %639 = vmatpush2.msra.mxu0 0.0
    %640 = vmatprep.subr.mxu0 0.0
    %641 = vmatpush2.msra.mxu0 0.0
    %642 = vmatprep.subr.mxu0 0.0
    %643 = vmatpush2.msra.mxu0 0.0
    %644 = vmatprep.subr.mxu0 0.0
    %645 = vmatpush2.msra.mxu0 0.0
    %646 = vmatprep.subr.mxu0 0.0
    %647 = vmatpush2.msra.mxu0 0.0
    %648 = vmatprep.subr.mxu0 0.0
    %649 = vmatpush2.msra.mxu0 0.0
    %650 = vmatprep.subr.mxu0 0.0
    %651 = vmatpush2.msra.mxu0 0.0
    %652 = vmatprep.subr.mxu0 0.0
    %653 = vmatpush2.msra.mxu0 0.0
    %654 = vmatprep.subr.mxu0 0.0
    %655 = vmatpush2.msra.mxu0 0.0
    %656 = vmatprep.subr.mxu0 0.0
    %657 = vmatpush2.msra.mxu0 0.0
    %658 = vmatprep.subr.mxu0 0.0
    %659 = vmatpush2.msra.mxu0 0.0
    %660 = vmatprep.mubr.f32.mxu0 0.0
    %661 = vmatmul.mubr.f32.gmra.mxu0 %v594
    %v662 = vpop.f32.mrf.mxu0
    %v663 = vadd.f32 0.0, %v662
    %v664 = vpop.f32.mrf.mxu0
    %665 = vdwg.mxu0
    %v667 = vrot.slane %v663, 2
    %v669 = vadd.f32 %v118, %v667
    %v670 = vtanh.pop %v669
    %v671 = vld [vmem:[%s4] sm:$0xff]
    %v672 = vld [vmem:[%s4 + $0x8] sm:$0xff]
    %v673 = vld [vmem:[%s4 + $0x10] sm:$0xff]
    %v674 = vld [vmem:[%s4 + $0x18] sm:$0xff]
    %v675 = vld [vmem:[%s5] sm:$0x1]
    %v677 = vlaneseq
    %v678 = vshrl.u32 %v677, 7
    %v679 = vsub.s32 0, %v678
    %v680 = vrot.slane %v675, %v679
    %v683 = vrot.slane %v670, 6
    %v684 = vsel %vm122, %v683, 0
    %686 = vmatprep.subr.mxu0 0.0
    %687 = vmatpush1.msra.mxu0 0.0
    %688 = vmatprep.subr.mxu0 0.0
    %689 = vmatpush1.msra.mxu0 0.0
    %690 = vmatprep.subr.mxu0 0.0
    %691 = vmatpush1.msra.mxu0 0.0
    %692 = vmatprep.subr.mxu0 0.0
    %693 = vmatpush1.msra.mxu0 0.0
    %694 = vmatprep.subr.mxu0 0.0
    %695 = vmatpush1.msra.mxu0 0.0
    %696 = vmatprep.subr.mxu0 0.0
    %697 = vmatpush1.msra.mxu0 0.0
    %698 = vmatprep.subr.mxu0 0.0
    %699 = vmatpush1.msra.mxu0 0.0
    %700 = vmatprep.subr.mxu0 0.0
    %701 = vmatpush1.msra.mxu0 0.0
    %702 = vmatprep.subr.mxu0 0.0
    %703 = vmatpush1.msra.mxu0 0.0
    %704 = vmatprep.subr.mxu0 0.0
    %705 = vmatpush1.msra.mxu0 0.0
    %706 = vmatprep.subr.mxu0 0.0
    %707 = vmatpush1.msra.mxu0 0.0
    %708 = vmatprep.subr.mxu0 0.0
    %709 = vmatpush1.msra.mxu0 0.0
    %710 = vmatprep.subr.mxu0 0.0
    %711 = vmatpush1.msra.mxu0 %v674
    %712 = vmatprep.subr.mxu0 0.0
    %713 = vmatpush1.msra.mxu0 %v673
    %714 = vmatprep.subr.mxu0 0.0
    %715 = vmatpush1.msra.mxu0 %v672
    %716 = vmatprep.subr.mxu0 0.0
    %717 = vmatpush1.msra.mxu0 %v671
    %718 = vmatprep.subr.mxu0 0.0
    %719 = vmatpush2.msra.mxu0 0.0
    %720 = vmatprep.subr.mxu0 0.0
    %721 = vmatpush2.msra.mxu0 0.0
    %722 = vmatprep.subr.mxu0 0.0
    %723 = vmatpush2.msra.mxu0 0.0
    %724 = vmatprep.subr.mxu0 0.0
    %725 = vmatpush2.msra.mxu0 0.0
    %726 = vmatprep.subr.mxu0 0.0
    %727 = vmatpush2.msra.mxu0 0.0
    %728 = vmatprep.subr.mxu0 0.0
    %729 = vmatpush2.msra.mxu0 0.0
    %730 = vmatprep.subr.mxu0 0.0
    %731 = vmatpush2.msra.mxu0 0.0
    %732 = vmatprep.subr.mxu0 0.0
    %733 = vmatpush2.msra.mxu0 0.0
    %734 = vmatprep.subr.mxu0 0.0
    %735 = vmatpush2.msra.mxu0 0.0
    %736 = vmatprep.subr.mxu0 0.0
    %737 = vmatpush2.msra.mxu0 0.0
    %738 = vmatprep.subr.mxu0 0.0
    %739 = vmatpush2.msra.mxu0 0.0
    %740 = vmatprep.subr.mxu0 0.0
    %741 = vmatpush2.msra.mxu0 0.0
    %742 = vmatprep.subr.mxu0 0.0
    %743 = vmatpush2.msra.mxu0 0.0
    %744 = vmatprep.subr.mxu0 0.0
    %745 = vmatpush2.msra.mxu0 0.0
    %746 = vmatprep.subr.mxu0 0.0
    %747 = vmatpush2.msra.mxu0 0.0
    %748 = vmatprep.subr.mxu0 0.0
    %749 = vmatpush2.msra.mxu0 0.0
    %750 = vmatprep.mubr.f32.mxu0 0.0
    %751 = vmatmul.mubr.f32.gmra.mxu0 %v684
    %v752 = vpop.f32.mrf.mxu0
    %v753 = vadd.f32 %v680, %v752
    %v754 = vpop.f32.mrf.mxu0
    %755 = vdwg.mxu0
    %vm756 = vcmask 9216
    %757 = vst.msk [vmem:[#allocation2] sm:$0x3] %vm756, %v753
    // Predicated region
    $region26: #{simple_rnn_forward.1} parent=1 // pred_check
      _
    $region27: #{simple_rnn_forward.1} parent=1 // pred_check_branch
      %759 = sbr.rel (0) target = $region29
    $region28: #{simple_rnn_forward.1} parent=1 // pred_region
      %s761 = ssub.s32 32, 32
      %762 = vsyncadd [#allocation3], %s761
      %s764 = sshll.u32 [#allocation2], 4
      %s765 = int_to_ptr.vmem [resolvable:$true] %s764
      %767 = dma.vmem_to_hbm [thread:$0]  %s765, 32, %s6, [#allocation3]
    $region29: #{simple_rnn_forward.1} parent=1 // pred_fallthru
      _
    // Predicated region
    $region30: #{simple_rnn_forward.1} parent=1 // pred_check
      _
    $region31: #{simple_rnn_forward.1} parent=1 // pred_check_branch
      %769 = sbr.rel (0) target = $region33
    $region32: #{simple_rnn_forward.1} parent=1 // pred_region
      %770 = dma.done [#allocation3], 32
    $region33: #{simple_rnn_forward.1} parent=1 // pred_fallthru
      _
    %771 = vsyncpa [#allocation3], 1

</llo_original>
